<compile_context>
chip_gen: v6e
topology: v6e:2x2x1
jax: 0.10.0
libtpu: 0.0.40
codegen_flags: <defaults>
</compile_context>

<pallas_src>
import functools

import jax
import jax.numpy as jnp
from jax.experimental import pallas as pl
from jax.experimental.pallas import tpu as pltpu


def _bn_stats_kernel(x_ref, sum_ref, sumsq_ref):
    """Accumulate per-channel sum and sum-of-squares across the batch grid axis."""
    @pl.when(pl.program_id(0) == 0)
    def _():
        sum_ref[...] = jnp.zeros_like(sum_ref)
        sumsq_ref[...] = jnp.zeros_like(sumsq_ref)

    x = x_ref[0].astype(jnp.float32)                         # (C, L)
    sum_ref[...] += jnp.sum(x, axis=1, keepdims=True)        # (C, 1)
    sumsq_ref[...] += jnp.sum(x * x, axis=1, keepdims=True)  # (C, 1)


def _shifted_taps(xn):
    """Return x[l-1] and x[l+1] taps (zero boundary fill); both (C, L)."""
    C, L = xn.shape
    if L % 128 == 0:
        # Lane-aligned: XLU rotates (free slot vs VPU/load) + boundary mask.
        lane = jax.lax.broadcasted_iota(jnp.int32, (1, L), 1)
        x_m1 = jnp.where(lane >= 1, pltpu.roll(xn, shift=1, axis=1), 0.0)
        x_p1 = jnp.where(lane < L - 1, pltpu.roll(xn, shift=L - 1, axis=1), 0.0)
    else:
        # Small / unaligned L: exact-L shifted copies (no L+2 buffer).
        zcol = jnp.zeros((C, 1), dtype=xn.dtype)
        x_m1 = jnp.concatenate([zcol, xn[:, : L - 1]], axis=1)
        x_p1 = jnp.concatenate([xn[:, 1:], zcol], axis=1)
    return x_m1, x_p1


def _temp_conv_kernel(scale_ref, shift_ref, w_ref, b_ref, x_ref, o_ref,
                      *, compute_dtype):
    x = x_ref[0].astype(jnp.float32)                          # (C, L)

    # Folded BatchNorm (global batch stats precomputed as scale/shift) + ReLU.
    xn = jnp.maximum(x * scale_ref[...] + shift_ref[...], 0.0)

    # Conv1d(k=3, s=1, p=1): stack the three taps along the channel axis and
    # contract once over 3C.  Result is already in (C_out, L) output layout.
    x_m1, x_p1 = _shifted_taps(xn)
    xs = jnp.concatenate([x_m1, xn, x_p1], axis=0)            # (3C, L)
    y = jax.lax.dot_general(
        w_ref[...].astype(compute_dtype), xs.astype(compute_dtype),
        dimension_numbers=(((1,), (0,)), ((), ())),
        preferred_element_type=jnp.float32)                   # (C_out, L)
    y = y + b_ref[...]                                        # (C_out, 1) bias

    # Dropout(p=0) is identity; final ReLU.
    o_ref[0] = jnp.maximum(y, 0.0).astype(o_ref.dtype)


@jax.jit
def temp_conv_forward(x, gamma, beta, weight, bias):
    """x: (N, C, L) f32; weight: (C_out, C, 3); gamma/beta: (C,*); bias: (C_out,*)."""
    eps = 1e-5
    N, C, L = x.shape
    C_out, C_in, K = weight.shape
    assert C_in == C and K == 3

    # ---- Pass 1: per-channel batch statistics (training-mode BatchNorm1d) ----
    sums, sumsqs = pl.pallas_call(
        _bn_stats_kernel,
        out_shape=(jax.ShapeDtypeStruct((C, 1), jnp.float32),
                   jax.ShapeDtypeStruct((C, 1), jnp.float32)),
        grid=(N,),
        in_specs=[pl.BlockSpec((1, C, L), lambda n: (n, 0, 0))],
        out_specs=(pl.BlockSpec((C, 1), lambda n: (0, 0)),
                   pl.BlockSpec((C, 1), lambda n: (0, 0))),
        compiler_params=pltpu.CompilerParams(
            dimension_semantics=("arbitrary",),   # accumulation across the grid
            vmem_limit_bytes=32 * 1024 * 1024,
        ),
    )(x)

    inv_cnt = 1.0 / float(N * L)
    mean = sums * inv_cnt                                     # (C, 1)
    var = sumsqs * inv_cnt - mean * mean                      # biased var (torch training BN)
    scale = gamma.reshape(C, 1) * jax.lax.rsqrt(var + eps)    # (C, 1)
    shift = beta.reshape(C, 1) - mean * scale                 # (C, 1)

    # Fold conv weight to (C_out, 3C): w_folded[o, k*C + c] = weight[o, c, k].
    w_folded = jnp.transpose(weight, (0, 2, 1)).reshape(C_out, K * C)
    b_col = bias.reshape(C_out, 1)

    # bf16 MXU operands only when the contraction is deep enough to matter.
    compute_dtype = jnp.bfloat16 if (K * C) >= 128 else jnp.float32
    kernel = functools.partial(_temp_conv_kernel, compute_dtype=compute_dtype)

    # ---- Pass 2: tiled affine + ReLU + fused-tap conv + ReLU ----
    return pl.pallas_call(
        kernel,
        out_shape=jax.ShapeDtypeStruct((N, C_out, L), jnp.float32),
        grid=(N,),
        in_specs=[
            pl.BlockSpec((C, 1), lambda n: (0, 0)),           # scale (resident)
            pl.BlockSpec((C, 1), lambda n: (0, 0)),           # shift (resident)
            pl.BlockSpec((C_out, K * C), lambda n: (0, 0)),   # folded weight (resident)
            pl.BlockSpec((C_out, 1), lambda n: (0, 0)),       # bias (resident)
            pl.BlockSpec((1, C, L), lambda n: (n, 0, 0)),     # x tile (one batch row)
        ],
        out_specs=pl.BlockSpec((1, C_out, L), lambda n: (n, 0, 0)),
        compiler_params=pltpu.CompilerParams(
            dimension_semantics=("parallel",),                # megacore split on v7x
            vmem_limit_bytes=32 * 1024 * 1024,
        ),
    )(scale, shift, w_folded, b_col, x)


def _reference_forward(x, gamma, beta, weight, bias):
    """Pure-JAX reference mirroring the PyTorch forward (training-mode BN)."""
    mean = jnp.mean(x, axis=(0, 2), keepdims=True)
    var = jnp.mean(jnp.square(x - mean), axis=(0, 2), keepdims=True)
    xn = (x - mean) / jnp.sqrt(var + 1e-5)
    xn = xn * gamma.reshape(1, -1, 1) + beta.reshape(1, -1, 1)
    xn = jnp.maximum(xn, 0.0)
    y = jax.lax.conv_general_dilated(
        xn, weight,
        window_strides=(1,),
        padding=[(1, 1)],
        dimension_numbers=("NCH", "OIH", "NCH"),
    )
    y = y + bias.reshape(1, -1, 1)
    return jnp.maximum(y, 0.0)


if __name__ == "__main__":
    # Module only type-checks when in_channels == out_channels (BN with
    # out_channels features is applied BEFORE the conv).
    N, C, L = 2, 4, 16
    K = 3

    key = jax.random.PRNGKey(0)
    kx, kg, kb, kw, kbias = jax.random.split(key, 5)

    x = jax.random.normal(kx, (N, C, L), dtype=jnp.float32)
    gamma = 1.0 + 0.1 * jax.random.normal(kg, (C, 1), dtype=jnp.float32)   # BN weight
    beta = 0.1 * jax.random.normal(kb, (C, 1), dtype=jnp.float32)          # BN bias
    weight = 0.2 * jax.random.normal(kw, (C, C, K), dtype=jnp.float32)     # Conv1d weight (O, I, K)
    bias = 0.1 * jax.random.normal(kbias, (C, 1), dtype=jnp.float32)       # Conv1d bias

    out = temp_conv_forward(x, gamma, beta, weight, bias)
    out = jax.block_until_ready(out)

    ref = _reference_forward(x, gamma, beta, weight, bias)
    assert out.shape == (N, C, L)
    assert jnp.allclose(out, ref, atol=1e-4, rtol=1e-4), "mismatch vs reference"

    print("KERNEL_OK")
</pallas_src>

<mosaic_0001>
module attributes {stable_mosaic.version = 11 : i64} {
  func.func @_bn_stats_kernel(%arg0: i32, %arg1: memref<1x4x16xf32, #tpu.memory_space<vmem>>, %arg2: memref<4x1xf32, #tpu.memory_space<vmem>>, %arg3: memref<4x1xf32, #tpu.memory_space<vmem>>) attributes {dimension_semantics = [#tpu.dimension_semantics<arbitrary>], iteration_bounds = array<i64: 2>, scalar_prefetch = 0 : i64, scratch_operands = 0 : i64, tpu.core_type = #tpu.core_type<tc>, window_params = [{transform_indices = @transform_0, window_bounds = array<i64: 1, 4, 16>}, {pipeline_mode = #tpu.pipeline_mode<synchronous>, transform_indices = @transform_1, window_bounds = array<i64: 4, 1>}, {pipeline_mode = #tpu.pipeline_mode<synchronous>, transform_indices = @transform_2, window_bounds = array<i64: 4, 1>}]} {
    %c0_i32 = arith.constant 0 : i32
    %0 = arith.cmpi eq, %arg0, %c0_i32 : i32
    %1 = arith.extui %0 : i1 to i32
    %c0_i32_0 = arith.constant 0 : i32
    %2 = arith.cmpi ne, %1, %c0_i32_0 : i32
    scf.if %2 {
      %cst_12 = arith.constant 0.000000e+00 : f32
      %16 = vector.broadcast %cst_12 : f32 to vector<4x1xf32>
      %c0_13 = arith.constant 0 : index
      %c0_14 = arith.constant 0 : index
      %17 = vector.load %arg2[%c0_13, %c0_14] : memref<4x1xf32, #tpu.memory_space<vmem>>, vector<4x1xf32>
      tpu.vector_store %arg2[%c0_13, %c0_14], %16 {strides = array<i32>} : memref<4x1xf32, #tpu.memory_space<vmem>>, vector<4x1xf32>,
      %cst_15 = arith.constant 0.000000e+00 : f32
      %18 = vector.broadcast %cst_15 : f32 to vector<4x1xf32>
      %c0_16 = arith.constant 0 : index
      %c0_17 = arith.constant 0 : index
      %19 = vector.load %arg3[%c0_16, %c0_17] : memref<4x1xf32, #tpu.memory_space<vmem>>, vector<4x1xf32>
      tpu.vector_store %arg3[%c0_16, %c0_17], %18 {strides = array<i32>} : memref<4x1xf32, #tpu.memory_space<vmem>>, vector<4x1xf32>,
    } else {
    }
    %c0 = arith.constant 0 : index
    %c0_1 = arith.constant 0 : index
    %c0_2 = arith.constant 0 : index
    %3 = vector.load %arg1[%c0, %c0_1, %c0_2] : memref<1x4x16xf32, #tpu.memory_space<vmem>>, vector<1x4x16xf32>
    %4 = vector.shape_cast %3 : vector<1x4x16xf32> to vector<4x16xf32>
    %c0_3 = arith.constant 0 : index
    %c0_4 = arith.constant 0 : index
    %5 = vector.load %arg2[%c0_3, %c0_4] : memref<4x1xf32, #tpu.memory_space<vmem>>, vector<4x1xf32>
    %cst = arith.constant dense<0.000000e+00> : vector<4xf32>
    %6 = vector.multi_reduction <add>, %4, %cst [1] : vector<4x16xf32> to vector<4xf32>
    %7 = vector.shape_cast %6 : vector<4xf32> to vector<4x1xf32>
    %8 = arith.addf %5, %7 : vector<4x1xf32>
    %c0_5 = arith.constant 0 : index
    %c0_6 = arith.constant 0 : index
    %9 = vector.load %arg2[%c0_5, %c0_6] : memref<4x1xf32, #tpu.memory_space<vmem>>, vector<4x1xf32>
    tpu.vector_store %arg2[%c0_5, %c0_6], %8 {strides = array<i32>} : memref<4x1xf32, #tpu.memory_space<vmem>>, vector<4x1xf32>,
    %c0_7 = arith.constant 0 : index
    %c0_8 = arith.constant 0 : index
    %10 = vector.load %arg3[%c0_7, %c0_8] : memref<4x1xf32, #tpu.memory_space<vmem>>, vector<4x1xf32>
    %11 = arith.mulf %4, %4 : vector<4x16xf32>
    %cst_9 = arith.constant dense<0.000000e+00> : vector<4xf32>
    %12 = vector.multi_reduction <add>, %11, %cst_9 [1] : vector<4x16xf32> to vector<4xf32>
    %13 = vector.shape_cast %12 : vector<4xf32> to vector<4x1xf32>
    %14 = arith.addf %10, %13 : vector<4x1xf32>
    %c0_10 = arith.constant 0 : index
    %c0_11 = arith.constant 0 : index
    %15 = vector.load %arg3[%c0_10, %c0_11] : memref<4x1xf32, #tpu.memory_space<vmem>>, vector<4x1xf32>
    tpu.vector_store %arg3[%c0_10, %c0_11], %14 {strides = array<i32>} : memref<4x1xf32, #tpu.memory_space<vmem>>, vector<4x1xf32>,
    return
  }
  func.func @transform_0(%arg0: i32) -> (i32, i32, i32) {
    %c0_i32 = arith.constant 0 : i32
    %c0_i32_0 = arith.constant 0 : i32
    %c0_i32_1 = arith.constant 0 : i32
    return %arg0, %c0_i32, %c0_i32_0 : i32, i32, i32
  }
  func.func @transform_1(%arg0: i32) -> (i32, i32) {
    %c0_i32 = arith.constant 0 : i32
    %c0_i32_0 = arith.constant 0 : i32
    %c0_i32_1 = arith.constant 0 : i32
    return %c0_i32, %c0_i32_0 : i32, i32
  }
  func.func @transform_2(%arg0: i32) -> (i32, i32) {
    %c0_i32 = arith.constant 0 : i32
    %c0_i32_0 = arith.constant 0 : i32
    %c0_i32_1 = arith.constant 0 : i32
    return %c0_i32, %c0_i32_0 : i32, i32
  }
}

module attributes {stable_mosaic.version = 11 : i64} {
  func.func @_temp_conv_kernel(%arg0: i32, %arg1: memref<4x1xf32, #tpu.memory_space<vmem>>, %arg2: memref<4x1xf32, #tpu.memory_space<vmem>>, %arg3: memref<4x12xf32, #tpu.memory_space<vmem>>, %arg4: memref<4x1xf32, #tpu.memory_space<vmem>>, %arg5: memref<1x4x16xf32, #tpu.memory_space<vmem>>, %arg6: memref<1x4x16xf32, #tpu.memory_space<vmem>>) attributes {dimension_semantics = [#tpu.dimension_semantics<parallel>], iteration_bounds = array<i64: 2>, scalar_prefetch = 0 : i64, scratch_operands = 0 : i64, tpu.core_type = #tpu.core_type<tc>, window_params = [{pipeline_mode = #tpu.pipeline_mode<synchronous>, transform_indices = @transform_0, window_bounds = array<i64: 4, 1>}, {pipeline_mode = #tpu.pipeline_mode<synchronous>, transform_indices = @transform_1, window_bounds = array<i64: 4, 1>}, {pipeline_mode = #tpu.pipeline_mode<synchronous>, transform_indices = @transform_2, window_bounds = array<i64: 4, 12>}, {pipeline_mode = #tpu.pipeline_mode<synchronous>, transform_indices = @transform_3, window_bounds = array<i64: 4, 1>}, {transform_indices = @transform_4, window_bounds = array<i64: 1, 4, 16>}, {transform_indices = @transform_5, window_bounds = array<i64: 1, 4, 16>}]} {
    %c0 = arith.constant 0 : index
    %c0_0 = arith.constant 0 : index
    %c0_1 = arith.constant 0 : index
    %0 = vector.load %arg5[%c0, %c0_0, %c0_1] : memref<1x4x16xf32, #tpu.memory_space<vmem>>, vector<1x4x16xf32>
    %1 = vector.shape_cast %0 : vector<1x4x16xf32> to vector<4x16xf32>
    %c0_2 = arith.constant 0 : index
    %c0_3 = arith.constant 0 : index
    %2 = vector.load %arg1[%c0_2, %c0_3] : memref<4x1xf32, #tpu.memory_space<vmem>>, vector<4x1xf32>
    %3 = vector.broadcast %2 : vector<4x1xf32> to vector<4x16xf32>
    %4 = arith.mulf %1, %3 : vector<4x16xf32>
    %c0_4 = arith.constant 0 : index
    %c0_5 = arith.constant 0 : index
    %5 = vector.load %arg2[%c0_4, %c0_5] : memref<4x1xf32, #tpu.memory_space<vmem>>, vector<4x1xf32>
    %6 = vector.broadcast %5 : vector<4x1xf32> to vector<4x16xf32>
    %7 = arith.addf %4, %6 : vector<4x16xf32>
    %cst = arith.constant 0.000000e+00 : f32
    %8 = vector.broadcast %cst : f32 to vector<4x16xf32>
    %9 = arith.maximumf %7, %8 : vector<4x16xf32>
    %cst_6 = arith.constant 0.000000e+00 : f32
    %10 = vector.broadcast %cst_6 : f32 to vector<4x1xf32>
    %11 = vector.extract_strided_slice %9 {offsets = [0, 0], sizes = [4, 15], strides = [1, 1]} : vector<4x16xf32> to vector<4x15xf32>
    %12 = tpu.concatenate %10, %11 in 1 : vector<4x1xf32>, vector<4x15xf32> -> vector<4x16xf32>
    %13 = vector.extract_strided_slice %9 {offsets = [0, 1], sizes = [4, 15], strides = [1, 1]} : vector<4x16xf32> to vector<4x15xf32>
    %14 = tpu.concatenate %13, %10 in 1 : vector<4x15xf32>, vector<4x1xf32> -> vector<4x16xf32>
    %15 = tpu.concatenate %12, %9, %14 in 0 : vector<4x16xf32>, vector<4x16xf32>, vector<4x16xf32> -> vector<12x16xf32>
    %c0_7 = arith.constant 0 : index
    %c0_8 = arith.constant 0 : index
    %16 = vector.load %arg3[%c0_7, %c0_8] : memref<4x12xf32, #tpu.memory_space<vmem>>, vector<4x12xf32>
    %cst_9 = arith.constant dense<0.000000e+00> : vector<4x16xf32>
    %17 = tpu.matmul %16, %15, %cst_9 {dimension_numbers = #tpu.dot_dimension_numbers<[1], [0], [0], [1], [0, 0, 1, 1], [], []>} : vector<4x12xf32>, vector<12x16xf32>, vector<4x16xf32> -> vector<4x16xf32>
    %c0_10 = arith.constant 0 : index
    %c0_11 = arith.constant 0 : index
    %18 = vector.load %arg4[%c0_10, %c0_11] : memref<4x1xf32, #tpu.memory_space<vmem>>, vector<4x1xf32>
    %19 = vector.broadcast %18 : vector<4x1xf32> to vector<4x16xf32>
    %20 = arith.addf %17, %19 : vector<4x16xf32>
    %cst_12 = arith.constant 0.000000e+00 : f32
    %21 = vector.broadcast %cst_12 : f32 to vector<4x16xf32>
    %22 = arith.maximumf %20, %21 : vector<4x16xf32>
    %c0_13 = arith.constant 0 : index
    %c0_14 = arith.constant 0 : index
    %c0_15 = arith.constant 0 : index
    %23 = vector.load %arg6[%c0_13, %c0_14, %c0_15] : memref<1x4x16xf32, #tpu.memory_space<vmem>>, vector<1x4x16xf32>
    %24 = vector.shape_cast %23 : vector<1x4x16xf32> to vector<4x16xf32>
    %25 = vector.shape_cast %22 : vector<4x16xf32> to vector<1x4x16xf32>
    tpu.vector_store %arg6[%c0_13, %c0_14, %c0_15], %25 {strides = array<i32>} : memref<1x4x16xf32, #tpu.memory_space<vmem>>, vector<1x4x16xf32>,
    return
  }
  func.func @transform_0(%arg0: i32) -> (i32, i32) {
    %c0_i32 = arith.constant 0 : i32
    %c0_i32_0 = arith.constant 0 : i32
    %c0_i32_1 = arith.constant 0 : i32
    return %c0_i32, %c0_i32_0 : i32, i32
  }
  func.func @transform_1(%arg0: i32) -> (i32, i32) {
    %c0_i32 = arith.constant 0 : i32
    %c0_i32_0 = arith.constant 0 : i32
    %c0_i32_1 = arith.constant 0 : i32
    return %c0_i32, %c0_i32_0 : i32, i32
  }
  func.func @transform_2(%arg0: i32) -> (i32, i32) {
    %c0_i32 = arith.constant 0 : i32
    %c0_i32_0 = arith.constant 0 : i32
    %c0_i32_1 = arith.constant 0 : i32
    return %c0_i32, %c0_i32_0 : i32, i32
  }
  func.func @transform_3(%arg0: i32) -> (i32, i32) {
    %c0_i32 = arith.constant 0 : i32
    %c0_i32_0 = arith.constant 0 : i32
    %c0_i32_1 = arith.constant 0 : i32
    return %c0_i32, %c0_i32_0 : i32, i32
  }
  func.func @transform_4(%arg0: i32) -> (i32, i32, i32) {
    %c0_i32 = arith.constant 0 : i32
    %c0_i32_0 = arith.constant 0 : i32
    %c0_i32_1 = arith.constant 0 : i32
    return %arg0, %c0_i32, %c0_i32_0 : i32, i32, i32
  }
  func.func @transform_5(%arg0: i32) -> (i32, i32, i32) {
    %c0_i32 = arith.constant 0 : i32
    %c0_i32_0 = arith.constant 0 : i32
    %c0_i32_1 = arith.constant 0 : i32
    return %arg0, %c0_i32, %c0_i32_0 : i32, i32, i32
  }
}

</mosaic_0001>

<llo_original>
// kernel: temp_conv_forward.2
$region0: #{temp_conv_forward.2}
  #allocation0 [shape = 'u32[]', space=smem, size = 0x4, offset = 0x4, fixed_abs, tag = 'smem constant byte address 0x4 - core index']
  #allocation1 [shape = 'u32[144,128]{1,0:T(1,128)}', space=vmem, size = 0x12000, scoped, tag = 'internal scratch']
  %s0 = inlined_call_operand.hbm [shape: f32[2,4,16], index: 0, kind: input, shape index: {}]
  %s1 = inlined_call_operand.vmem [shape: f32[4,1], index: 1, kind: output, shape index: {0}]
  %s2 = inlined_call_operand.vmem [shape: f32[4,1], index: 2, kind: output, shape index: {1}]
  %3 = xla_tuple %s1, %s2
  %s4 = sld [smem:[#allocation0]]
  $region53: #{temp_conv_forward.2} parent=0
    _
  %s6 = ssub.s32 1, %s4
  %s7 = scalar_select 0, %s6, %s4
  $region1: #{temp_conv_forward.2} parent=0
    #allocation2 [shape = 'u8[4096]{0}', space=vmem, size = 0x1000, scoped, tag = 'input window, operand 0']
    #allocation3 [shape = 's32[2]{0}', space=sflag, size = 0x8, scoped, tag = 'scoped memory for temp_conv_forward.2']
    %8 = vsyncpa [#allocation3], 0
    %s9 = scalar_lea.sflag [#allocation3], 1
    %10 = vsyncpa %s9, 0
    loop: start=0, step=1, limit=4
    $region2: #{temp_conv_forward.2} parent=1 // loop_pre_header
      _
    $region3: #{temp_conv_forward.2} parent=1 // loop_header
      %s12 = sphi 0, %s16
      %p13 = scmp.ge.s32.totalorder %s12, 4
      %s22 = sphi 0, %s24
      %s25 = sphi 0, %s22
      %s26 = sphi 0, %s25
      %s42 = sphi 0, %s26
      %s46 = sphi 0, %s46
      %s48 = sphi 0, %s46
      %s49 = sphi 0, %s48
      %s63 = sphi 0, %s49
      %s67 = sphi 0, %s67
      %s69 = sphi 0, %s67
      %s70 = sphi 0, %s69
      %s84 = sphi 0, %s70
    $region4: #{temp_conv_forward.2} parent=1 // loop_header_branch
      %15 = sbr.rel (%p13) target = $region8
    $region5: #{temp_conv_forward.2} parent=1 // loop_body
      %s17 = ssub.s32 %s12, 1
      %s18 = ssub.s32 %s12, 2
      %s19 = sadd.s32 %s12, 1
      %s20 = ssub.s32 %s12, %s19
      %p21 = scmp.eq.s32.totalorder %s20, 0
      %s23 = sadd.s32 %s22, 1
      %s24 = scalar_select %p21, %s22, %s23
      %p27 = pneg %p21
      %p28 = scmp.eq.s32.totalorder %s12, 1
      %p29 = por %p27, %p28
      %p30 = scmp.ne.s32.totalorder %s22, %s25
      %p31 = scmp.eq.s32.totalorder %s12, 0
      %p32 = por %p30, %p31
      %p33 = scmp.ne.s32.totalorder %s22, %s25
      %p34 = scmp.eq.s32.totalorder %s17, 1
      %p35 = por %p33, %p34
      %p36 = scmp.ne.s32.totalorder %s25, %s26
      %p37 = scmp.eq.s32.totalorder %s17, 0
      %p38 = por %p36, %p37
      %p39 = scmp.ne.s32.totalorder %s25, %s26
      %p40 = scmp.eq.s32.totalorder %s18, 1
      %p41 = por %p39, %p40
      %p43 = scmp.ne.s32.totalorder %s26, %s42
      %p44 = scmp.eq.s32.totalorder %s18, 0
      %p45 = por %p43, %p44
      %s47 = sadd.s32 %s46, 1
      %p50 = scmp.eq.s32.totalorder %s12, 1
      %p51 = scmp.ne.s32.totalorder %s46, %s48
      %p52 = scmp.eq.s32.totalorder %s12, 0
      %p53 = por %p51, %p52
      %p54 = scmp.ne.s32.totalorder %s46, %s48
      %p55 = scmp.eq.s32.totalorder %s17, 1
      %p56 = por %p54, %p55
      %p57 = scmp.ne.s32.totalorder %s48, %s49
      %p58 = scmp.eq.s32.totalorder %s17, 0
      %p59 = por %p57, %p58
      %p60 = scmp.ne.s32.totalorder %s48, %s49
      %p61 = scmp.eq.s32.totalorder %s18, 1
      %p62 = por %p60, %p61
      %p64 = scmp.ne.s32.totalorder %s49, %s63
      %p65 = scmp.eq.s32.totalorder %s18, 0
      %p66 = por %p64, %p65
      %s68 = sadd.s32 %s67, 1
      %p71 = scmp.eq.s32.totalorder %s12, 1
      %p72 = scmp.ne.s32.totalorder %s67, %s69
      %p73 = scmp.eq.s32.totalorder %s12, 0
      %p74 = por %p72, %p73
      %p75 = scmp.ne.s32.totalorder %s67, %s69
      %p76 = scmp.eq.s32.totalorder %s17, 1
      %p77 = por %p75, %p76
      %p78 = scmp.ne.s32.totalorder %s69, %s70
      %p79 = scmp.eq.s32.totalorder %s17, 0
      %p80 = por %p78, %p79
      %p81 = scmp.ne.s32.totalorder %s69, %s70
      %p82 = scmp.eq.s32.totalorder %s18, 1
      %p83 = por %p81, %p82
      %p85 = scmp.ne.s32.totalorder %s70, %s84
      %p86 = scmp.eq.s32.totalorder %s18, 0
      %p87 = por %p85, %p86
      %p88 = scmp.le.s32.totalorder 1, %s12
      %p89 = scmp.lt.s32.totalorder %s12, 3
      %p90 = pnand %p88, %p89
      %p91 = pneg %p90
      // Predicated region
      $region9: #{temp_conv_forward.2} parent=5 // pred_check
        _
      $region10: #{temp_conv_forward.2} parent=5 // pred_check_branch
        %93 = sbr.rel (%p90) target = $region12
      $region11: #{temp_conv_forward.2} parent=5 // pred_region
        %s94 = ssub.s32 %s12, 1
      $region12: #{temp_conv_forward.2} parent=5 // pred_fallthru
        _
      %p95 = scmp.lt.s32.totalorder %s12, 2
      // Predicated region
      $region13: #{temp_conv_forward.2} parent=5 // pred_check
        %p96 = pneg %p95
      $region14: #{temp_conv_forward.2} parent=5 // pred_check_branch
        %98 = sbr.rel (%p96) target = $region16
      $region15: #{temp_conv_forward.2} parent=5 // pred_region
        // Predicated region
        $region17: #{temp_conv_forward.2} parent=15 // pred_check
          %p99 = pneg %p32
        $region18: #{temp_conv_forward.2} parent=15 // pred_check_branch
          %101 = sbr.rel (%p99) target = $region20
        $region19: #{temp_conv_forward.2} parent=15 // pred_region
          %s102 = sand.u32 %s22, 1
          %s103 = scalar_lea.sflag [#allocation3], %s102
          %s104 = sand.u32 %s22, 1
          %s105 = smul.addr %s104, 4
          %s106 = scalar_lea.vmem [#allocation2], %s105
          %s108 = ssub.s32 64, 64
          %109 = vsyncadd %s103, %s108
          %s110 = smul.addr %s12, 64
          %s111 = scalar_lea.hbm %s0, %s110
          %s113 = sshll.u32 %s106, 4
          %s114 = int_to_ptr.vmem [resolvable:$true] %s113
          %116 = dma.hbm_to_vmem [thread:$0]  %s111, 64, %s114, %s103
        $region20: #{temp_conv_forward.2} parent=15 // pred_fallthru
          _
      $region16: #{temp_conv_forward.2} parent=5 // pred_fallthru
        _
      %p117 = scmp.le.s32.totalorder 1, %s12
      %p118 = scmp.lt.s32.totalorder %s12, 3
      %p119 = pnand %p117, %p118
      %p120 = pneg %p119
      // Predicated region
      $region21: #{temp_conv_forward.2} parent=5 // pred_check
        _
      $region22: #{temp_conv_forward.2} parent=5 // pred_check_branch
        %122 = sbr.rel (%p119) target = $region24
      $region23: #{temp_conv_forward.2} parent=5 // pred_region
        %s123 = ssub.s32 %s12, 1
        %s124 = sand.u32 %s25, 1
        %s125 = scalar_lea.sflag [#allocation3], %s124
        %s126 = sand.u32 %s25, 1
        %s127 = smul.addr %s126, 4
        %s128 = scalar_lea.vmem [#allocation2], %s127
        // Predicated region
        $region25: #{temp_conv_forward.2} parent=23 // pred_check
          %p129 = pneg %p38
        $region26: #{temp_conv_forward.2} parent=23 // pred_check_branch
          %131 = sbr.rel (%p129) target = $region28
        $region27: #{temp_conv_forward.2} parent=23 // pred_region
          %132 = dma.done %s125, 64
        $region28: #{temp_conv_forward.2} parent=23 // pred_fallthru
          _
        %s133 = sand.u32 %s25, 1
        %s134 = scalar_lea.sflag [#allocation3], %s133
        %s135 = sand.u32 %s25, 1
        %s136 = smul.addr %s135, 4
        %s137 = scalar_lea.vmem [#allocation2], %s136
        %p138 = pneg %p38
        %p139 = pneg %p35
        %p140 = pneg %p59
        %p141 = pneg %p56
        %p142 = pneg %p80
        %p143 = pneg %p77
        %p144 = scmp.eq.s32.totalorder %s17, 0
        // Predicated region
        $region29: #{temp_conv_forward.2} parent=23 // pred_check
          %p145 = pneg %p144
        $region30: #{temp_conv_forward.2} parent=23 // pred_check_branch
          %147 = sbr.rel (%p145) target = $region32
        $region31: #{temp_conv_forward.2} parent=23 // pred_region
          %vm148 = vcmask 3072
          %149 = vst.msk [vmem:[%s1] sm:$0xf] %vm148, 0.0
          %150 = vst.msk [vmem:[%s2] sm:$0xf] %vm148, 0.0
        $region32: #{temp_conv_forward.2} parent=23 // pred_fallthru
          _
        %v151 = vld [vmem:[%s128] sm:$0xf]
        %v152 = vld [vmem:[%s1] sm:$0xf]
        %vm153 = vcmask 125952
        %v154 = vsel %vm153, %v151, 0.0
        %155 = vadd.xlane.f32.xlu0 %v154
        %v156 = vpop.xlane.xlu0 %155
        %v157 = vadd.f32 %v152, %v156
        %vm158 = vcmask 3072
        %159 = vst.msk [vmem:[%s1] sm:$0xf] %vm158, %v157
        %v160 = vld [vmem:[%s2] sm:$0xf]
        %v161 = vmul.f32 %v151, %v151
        %v162 = vsel %vm153, %v161, 0.0
        %163 = vadd.xlane.f32.xlu0 %v162
        %v164 = vpop.xlane.xlu0 %163
        %v165 = vadd.f32 %v160, %v164
        %166 = vst.msk [vmem:[%s2] sm:$0xf] %vm158, %v165
        // Predicated region
        $region33: #{temp_conv_forward.2} parent=23 // pred_check
          %p167 = pneg %p56
        $region34: #{temp_conv_forward.2} parent=23 // pred_check_branch
          %169 = sbr.rel (%p167) target = $region36
        $region35: #{temp_conv_forward.2} parent=23 // pred_region
          _
        $region36: #{temp_conv_forward.2} parent=23 // pred_fallthru
          _
        // Predicated region
        $region37: #{temp_conv_forward.2} parent=23 // pred_check
          %p170 = pneg %p77
        $region38: #{temp_conv_forward.2} parent=23 // pred_check_branch
          %172 = sbr.rel (%p170) target = $region40
        $region39: #{temp_conv_forward.2} parent=23 // pred_region
          _
        $region40: #{temp_conv_forward.2} parent=23 // pred_fallthru
          _
        // Predicated region
        $region41: #{temp_conv_forward.2} parent=23 // pred_check
          %p173 = pneg %p56
        $region42: #{temp_conv_forward.2} parent=23 // pred_check_branch
          %175 = sbr.rel (%p173) target = $region44
        $region43: #{temp_conv_forward.2} parent=23 // pred_region
          _
        $region44: #{temp_conv_forward.2} parent=23 // pred_fallthru
          _
        // Predicated region
        $region45: #{temp_conv_forward.2} parent=23 // pred_check
          %p176 = pneg %p77
        $region46: #{temp_conv_forward.2} parent=23 // pred_check_branch
          %178 = sbr.rel (%p176) target = $region48
        $region47: #{temp_conv_forward.2} parent=23 // pred_region
          _
        $region48: #{temp_conv_forward.2} parent=23 // pred_fallthru
          _
      $region24: #{temp_conv_forward.2} parent=5 // pred_fallthru
        _
      %p179 = scmp.le.s32.totalorder 2, %s12
      // Predicated region
      $region49: #{temp_conv_forward.2} parent=5 // pred_check
        %p180 = pneg %p179
      $region50: #{temp_conv_forward.2} parent=5 // pred_check_branch
        %182 = sbr.rel (%p180) target = $region52
      $region51: #{temp_conv_forward.2} parent=5 // pred_region
        %s183 = ssub.s32 %s12, 2
      $region52: #{temp_conv_forward.2} parent=5 // pred_fallthru
        _
    $region6: #{temp_conv_forward.2} parent=1 // loop_footer
      %s16 = sadd.s32 1, %s12
    $region7: #{temp_conv_forward.2} parent=1 // loop_footer_branch
      %11 = sbr.rel target = $region3
    $region8: #{temp_conv_forward.2} parent=1 // loop_exit
      _
    %184 = vsyncpa [#allocation3], 1
    %s185 = scalar_lea.sflag [#allocation3], 1
    %186 = vsyncpa %s185, 1

// kernel: temp_conv_forward.3
$region0: #{temp_conv_forward.3}
  #allocation0 [shape = 'u32[]', space=smem, size = 0x4, offset = 0x4, fixed_abs, tag = 'smem constant byte address 0x4 - core index']
  #allocation1 [shape = 'u32[144,128]{1,0:T(1,128)}', space=vmem, size = 0x12000, scoped, tag = 'internal scratch']
  %s0 = inlined_call_operand.vmem [shape: f32[4,1], index: 0, kind: input, shape index: {}]
  %s1 = inlined_call_operand.vmem [shape: f32[4,1], index: 1, kind: input, shape index: {}]
  %s2 = inlined_call_operand.vmem [shape: f32[4,12], index: 2, kind: input, shape index: {}]
  %s3 = inlined_call_operand.vmem [shape: f32[4,1], index: 3, kind: input, shape index: {}]
  %s4 = inlined_call_operand.vmem [shape: f32[2,4,16], index: 4, kind: input, shape index: {}]
  %s5 = inlined_call_operand.hbm [shape: f32[2,4,16], index: 5, kind: output, shape index: {}]
  %s6 = sld [smem:[#allocation0]]
  $region53: #{temp_conv_forward.3} parent=0
    _
  %s8 = ssub.s32 1, %s6
  %s9 = scalar_select 0, %s8, %s6
  $region1: #{temp_conv_forward.3} parent=0
    #allocation2 [shape = 'u8[4096]{0}', space=vmem, size = 0x1000, scoped, tag = 'output window, operand 0']
    #allocation3 [shape = 's32[2]{0}', space=sflag, size = 0x8, scoped, tag = 'scoped memory for temp_conv_forward.3']
    %10 = vsyncpa [#allocation3], 0
    %s11 = scalar_lea.sflag [#allocation3], 1
    %12 = vsyncpa %s11, 0
    loop: start=0, step=1, limit=4
    $region2: #{temp_conv_forward.3} parent=1 // loop_pre_header
      _
    $region3: #{temp_conv_forward.3} parent=1 // loop_header
      %s14 = sphi 0, %s18
      %p15 = scmp.ge.s32.totalorder %s14, 4
      %s22 = sphi 0, %s22
      %s24 = sphi 0, %s22
      %s25 = sphi 0, %s24
      %s39 = sphi 0, %s25
      %s43 = sphi 0, %s43
      %s45 = sphi 0, %s43
      %s46 = sphi 0, %s45
      %s60 = sphi 0, %s46
      %s64 = sphi 0, %s64
      %s66 = sphi 0, %s64
      %s67 = sphi 0, %s66
      %s81 = sphi 0, %s67
      %s85 = sphi 0, %s85
      %s87 = sphi 0, %s85
      %s88 = sphi 0, %s87
      %s102 = sphi 0, %s88
      %s108 = sphi 0, %s110
      %s111 = sphi 0, %s108
      %s112 = sphi 0, %s111
      %s128 = sphi 0, %s112
      %s134 = sphi 0, %s136
      %s137 = sphi 0, %s134
      %s138 = sphi 0, %s137
      %s154 = sphi 0, %s138
    $region4: #{temp_conv_forward.3} parent=1 // loop_header_branch
      %17 = sbr.rel (%p15) target = $region8
    $region5: #{temp_conv_forward.3} parent=1 // loop_body
      %s19 = ssub.s32 %s14, 1
      %s20 = ssub.s32 %s14, 2
      %s21 = sadd.s32 %s14, 1
      %s23 = sadd.s32 %s22, 1
      %p26 = scmp.eq.s32.totalorder %s14, 1
      %p27 = scmp.ne.s32.totalorder %s22, %s24
      %p28 = scmp.eq.s32.totalorder %s14, 0
      %p29 = por %p27, %p28
      %p30 = scmp.ne.s32.totalorder %s22, %s24
      %p31 = scmp.eq.s32.totalorder %s19, 1
      %p32 = por %p30, %p31
      %p33 = scmp.ne.s32.totalorder %s24, %s25
      %p34 = scmp.eq.s32.totalorder %s19, 0
      %p35 = por %p33, %p34
      %p36 = scmp.ne.s32.totalorder %s24, %s25
      %p37 = scmp.eq.s32.totalorder %s20, 1
      %p38 = por %p36, %p37
      %p40 = scmp.ne.s32.totalorder %s25, %s39
      %p41 = scmp.eq.s32.totalorder %s20, 0
      %p42 = por %p40, %p41
      %s44 = sadd.s32 %s43, 1
      %p47 = scmp.eq.s32.totalorder %s14, 1
      %p48 = scmp.ne.s32.totalorder %s43, %s45
      %p49 = scmp.eq.s32.totalorder %s14, 0
      %p50 = por %p48, %p49
      %p51 = scmp.ne.s32.totalorder %s43, %s45
      %p52 = scmp.eq.s32.totalorder %s19, 1
      %p53 = por %p51, %p52
      %p54 = scmp.ne.s32.totalorder %s45, %s46
      %p55 = scmp.eq.s32.totalorder %s19, 0
      %p56 = por %p54, %p55
      %p57 = scmp.ne.s32.totalorder %s45, %s46
      %p58 = scmp.eq.s32.totalorder %s20, 1
      %p59 = por %p57, %p58
      %p61 = scmp.ne.s32.totalorder %s46, %s60
      %p62 = scmp.eq.s32.totalorder %s20, 0
      %p63 = por %p61, %p62
      %s65 = sadd.s32 %s64, 1
      %p68 = scmp.eq.s32.totalorder %s14, 1
      %p69 = scmp.ne.s32.totalorder %s64, %s66
      %p70 = scmp.eq.s32.totalorder %s14, 0
      %p71 = por %p69, %p70
      %p72 = scmp.ne.s32.totalorder %s64, %s66
      %p73 = scmp.eq.s32.totalorder %s19, 1
      %p74 = por %p72, %p73
      %p75 = scmp.ne.s32.totalorder %s66, %s67
      %p76 = scmp.eq.s32.totalorder %s19, 0
      %p77 = por %p75, %p76
      %p78 = scmp.ne.s32.totalorder %s66, %s67
      %p79 = scmp.eq.s32.totalorder %s20, 1
      %p80 = por %p78, %p79
      %p82 = scmp.ne.s32.totalorder %s67, %s81
      %p83 = scmp.eq.s32.totalorder %s20, 0
      %p84 = por %p82, %p83
      %s86 = sadd.s32 %s85, 1
      %p89 = scmp.eq.s32.totalorder %s14, 1
      %p90 = scmp.ne.s32.totalorder %s85, %s87
      %p91 = scmp.eq.s32.totalorder %s14, 0
      %p92 = por %p90, %p91
      %p93 = scmp.ne.s32.totalorder %s85, %s87
      %p94 = scmp.eq.s32.totalorder %s19, 1
      %p95 = por %p93, %p94
      %p96 = scmp.ne.s32.totalorder %s87, %s88
      %p97 = scmp.eq.s32.totalorder %s19, 0
      %p98 = por %p96, %p97
      %p99 = scmp.ne.s32.totalorder %s87, %s88
      %p100 = scmp.eq.s32.totalorder %s20, 1
      %p101 = por %p99, %p100
      %p103 = scmp.ne.s32.totalorder %s88, %s102
      %p104 = scmp.eq.s32.totalorder %s20, 0
      %p105 = por %p103, %p104
      %s106 = ssub.s32 %s14, %s21
      %p107 = scmp.eq.s32.totalorder %s106, 0
      %s109 = sadd.s32 %s108, 1
      %s110 = scalar_select %p107, %s108, %s109
      %p113 = pneg %p107
      %p114 = scmp.eq.s32.totalorder %s14, 1
      %p115 = por %p113, %p114
      %p116 = scmp.ne.s32.totalorder %s108, %s111
      %p117 = scmp.eq.s32.totalorder %s14, 0
      %p118 = por %p116, %p117
      %p119 = scmp.ne.s32.totalorder %s108, %s111
      %p120 = scmp.eq.s32.totalorder %s19, 1
      %p121 = por %p119, %p120
      %p122 = scmp.ne.s32.totalorder %s111, %s112
      %p123 = scmp.eq.s32.totalorder %s19, 0
      %p124 = por %p122, %p123
      %p125 = scmp.ne.s32.totalorder %s111, %s112
      %p126 = scmp.eq.s32.totalorder %s20, 1
      %p127 = por %p125, %p126
      %p129 = scmp.ne.s32.totalorder %s112, %s128
      %p130 = scmp.eq.s32.totalorder %s20, 0
      %p131 = por %p129, %p130
      %s132 = ssub.s32 %s14, %s21
      %p133 = scmp.eq.s32.totalorder %s132, 0
      %s135 = sadd.s32 %s134, 1
      %s136 = scalar_select %p133, %s134, %s135
      %p139 = pneg %p133
      %p140 = scmp.eq.s32.totalorder %s14, 1
      %p141 = por %p139, %p140
      %p142 = scmp.ne.s32.totalorder %s134, %s137
      %p143 = scmp.eq.s32.totalorder %s14, 0
      %p144 = por %p142, %p143
      %p145 = scmp.ne.s32.totalorder %s134, %s137
      %p146 = scmp.eq.s32.totalorder %s19, 1
      %p147 = por %p145, %p146
      %p148 = scmp.ne.s32.totalorder %s137, %s138
      %p149 = scmp.eq.s32.totalorder %s19, 0
      %p150 = por %p148, %p149
      %p151 = scmp.ne.s32.totalorder %s137, %s138
      %p152 = scmp.eq.s32.totalorder %s20, 1
      %p153 = por %p151, %p152
      %p155 = scmp.ne.s32.totalorder %s138, %s154
      %p156 = scmp.eq.s32.totalorder %s20, 0
      %p157 = por %p155, %p156
      %p158 = scmp.le.s32.totalorder 1, %s14
      %p159 = scmp.lt.s32.totalorder %s14, 3
      %p160 = pnand %p158, %p159
      %p161 = pneg %p160
      // Predicated region
      $region9: #{temp_conv_forward.3} parent=5 // pred_check
        _
      $region10: #{temp_conv_forward.3} parent=5 // pred_check_branch
        %163 = sbr.rel (%p160) target = $region12
      $region11: #{temp_conv_forward.3} parent=5 // pred_region
        %s164 = ssub.s32 %s14, 1
        // Predicated region
        $region13: #{temp_conv_forward.3} parent=11 // pred_check
          %p165 = pneg %p35
        $region14: #{temp_conv_forward.3} parent=11 // pred_check_branch
          %167 = sbr.rel (%p165) target = $region16
        $region15: #{temp_conv_forward.3} parent=11 // pred_region
          _
        $region16: #{temp_conv_forward.3} parent=11 // pred_fallthru
          _
        // Predicated region
        $region17: #{temp_conv_forward.3} parent=11 // pred_check
          %p168 = pneg %p56
        $region18: #{temp_conv_forward.3} parent=11 // pred_check_branch
          %170 = sbr.rel (%p168) target = $region20
        $region19: #{temp_conv_forward.3} parent=11 // pred_region
          _
        $region20: #{temp_conv_forward.3} parent=11 // pred_fallthru
          _
        // Predicated region
        $region21: #{temp_conv_forward.3} parent=11 // pred_check
          %p171 = pneg %p77
        $region22: #{temp_conv_forward.3} parent=11 // pred_check_branch
          %173 = sbr.rel (%p171) target = $region24
        $region23: #{temp_conv_forward.3} parent=11 // pred_region
          _
        $region24: #{temp_conv_forward.3} parent=11 // pred_fallthru
          _
        // Predicated region
        $region25: #{temp_conv_forward.3} parent=11 // pred_check
          %p174 = pneg %p98
        $region26: #{temp_conv_forward.3} parent=11 // pred_check_branch
          %176 = sbr.rel (%p174) target = $region28
        $region27: #{temp_conv_forward.3} parent=11 // pred_region
          _
        $region28: #{temp_conv_forward.3} parent=11 // pred_fallthru
          _
      $region12: #{temp_conv_forward.3} parent=5 // pred_fallthru
        _
      %p177 = scmp.lt.s32.totalorder %s14, 2
      // Predicated region
      $region29: #{temp_conv_forward.3} parent=5 // pred_check
        %p178 = pneg %p177
      $region30: #{temp_conv_forward.3} parent=5 // pred_check_branch
        %180 = sbr.rel (%p178) target = $region32
      $region31: #{temp_conv_forward.3} parent=5 // pred_region
        // Predicated region
        $region33: #{temp_conv_forward.3} parent=31 // pred_check
          %p181 = pneg %p118
        $region34: #{temp_conv_forward.3} parent=31 // pred_check_branch
          %183 = sbr.rel (%p181) target = $region36
        $region35: #{temp_conv_forward.3} parent=31 // pred_region
          %p184 = scmp.lt.s32.totalorder %s14, 1
          %s185 = scalar_select %p184, %s14, 1
          %s186 = smul.addr %s185, 4
          %s187 = scalar_lea.vmem %s4, %s186
        $region36: #{temp_conv_forward.3} parent=31 // pred_fallthru
          _
      $region32: #{temp_conv_forward.3} parent=5 // pred_fallthru
        _
      %p188 = scmp.le.s32.totalorder 1, %s14
      %p189 = scmp.lt.s32.totalorder %s14, 3
      %p190 = pnand %p188, %p189
      %p191 = pneg %p190
      // Predicated region
      $region37: #{temp_conv_forward.3} parent=5 // pred_check
        _
      $region38: #{temp_conv_forward.3} parent=5 // pred_check_branch
        %193 = sbr.rel (%p190) target = $region40
      $region39: #{temp_conv_forward.3} parent=5 // pred_region
        %s194 = ssub.s32 %s14, 1
        %p195 = pneg %p35
        %p196 = pneg %p32
        %p197 = pneg %p56
        %p198 = pneg %p53
        %p199 = pneg %p77
        %p200 = pneg %p74
        %p201 = pneg %p98
        %p202 = pneg %p95
        %p203 = scmp.lt.s32.totalorder %s19, 1
        %s204 = scalar_select %p203, %s19, 1
        %s205 = smul.addr %s204, 4
        %s206 = scalar_lea.vmem %s4, %s205
        %p207 = pneg %p124
        %p208 = pneg %p121
        %p209 = pneg %p150
        %p210 = pneg %p147
        %s211 = sand.u32 %s137, 1
        %s212 = scalar_lea.sflag [#allocation3], %s211
        %s213 = sand.u32 %s137, 1
        %s214 = smul.addr %s213, 4
        %s215 = scalar_lea.vmem [#allocation2], %s214
        %p216 = scmp.lt.s32.totalorder %s19, 1
        %s217 = scalar_select %p216, %s19, 1
        %s218 = smul.addr %s217, 4
        %s219 = scalar_lea.vmem %s4, %s218
        %v220 = vld [vmem:[%s219] sm:$0xf]
        %v221 = vld [vmem:[%s0] sm:$0xf]
        %223 = vset.pattern.permute.xlu0 0
        %224 = vperm.xlu0 %223, %v221
        %v225 = vpop.permute.xlu0 %224
        %v227 = vmul.f32 %v220, %v225
        %v228 = vld [vmem:[%s1] sm:$0xf]
        %230 = vset.pattern.permute.xlu0 0
        %231 = vperm.xlu0 %230, %v228
        %v232 = vpop.permute.xlu0 %231
        %v234 = vadd.f32 %v227, %v232
        %v235 = vmax.f32 %v234, 0.0
        %237 = vrot.lane.b32.xlu0 %v235, 1
        %v238 = vpop.permute.xlu0 %237
        %vm240 = vcmask 7168
        %v241 = vsel %vm240, 0.0, %v238
        %242 = vrot.lane.b32.xlu0 %v235, 127
        %v243 = vpop.permute.xlu0 %242
        %vm245 = vcmask 121856
        %v246 = vsel %vm245, %v243, 0.0
        %v247 = vrot.slane %v235, 4
        %vm249 = vcmask 1043456
        %v250 = vsel %vm249, %v241, %v247
        %v251 = vld [vmem:[%s2] sm:$0xf]
        %v252 = vld [vmem:[%s3] sm:$0xf]
        %254 = vset.pattern.permute.xlu0 0
        %255 = vperm.xlu0 %254, %v252
        %v256 = vpop.permute.xlu0 %255
        %vm258 = vcmask 97280
        %v260 = vsel %vm258, %v251, 0
        %v263 = vsel %vm249, %v246, 0
        %265 = vmatprep.subr.mxu0 0.0
        %266 = vmatpush1.msra.mxu0 0.0
        %267 = vmatprep.subr.mxu0 0.0
        %268 = vmatpush1.msra.mxu0 0.0
        %269 = vmatprep.subr.mxu0 0.0
        %270 = vmatpush1.msra.mxu0 0.0
        %271 = vmatprep.subr.mxu0 0.0
        %272 = vmatpush1.msra.mxu0 0.0
        %273 = vmatprep.subr.mxu0 0.0
        %274 = vmatpush1.msra.mxu0 0.0
        %275 = vmatprep.subr.mxu0 0.0
        %276 = vmatpush1.msra.mxu0 0.0
        %277 = vmatprep.subr.mxu0 0.0
        %278 = vmatpush1.msra.mxu0 0.0
        %279 = vmatprep.subr.mxu0 0.0
        %280 = vmatpush1.msra.mxu0 0.0
        %281 = vmatprep.subr.mxu0 0.0
        %282 = vmatpush1.msra.mxu0 0.0
        %283 = vmatprep.subr.mxu0 0.0
        %284 = vmatpush1.msra.mxu0 0.0
        %285 = vmatprep.subr.mxu0 0.0
        %286 = vmatpush1.msra.mxu0 0.0
        %287 = vmatprep.subr.mxu0 0.0
        %288 = vmatpush1.msra.mxu0 0.0
        %289 = vmatprep.subr.mxu0 0.0
        %290 = vmatpush1.msra.mxu0 0.0
        %291 = vmatprep.subr.mxu0 0.0
        %292 = vmatpush1.msra.mxu0 0.0
        %293 = vmatprep.subr.mxu0 0.0
        %294 = vmatpush1.msra.mxu0 %v263
        %295 = vmatprep.subr.mxu0 0.0
        %296 = vmatpush1.msra.mxu0 %v250
        %297 = vmatprep.subr.mxu0 0.0
        %298 = vmatpush2.msra.mxu0 0.0
        %299 = vmatprep.subr.mxu0 0.0
        %300 = vmatpush2.msra.mxu0 0.0
        %301 = vmatprep.subr.mxu0 0.0
        %302 = vmatpush2.msra.mxu0 0.0
        %303 = vmatprep.subr.mxu0 0.0
        %304 = vmatpush2.msra.mxu0 0.0
        %305 = vmatprep.subr.mxu0 0.0
        %306 = vmatpush2.msra.mxu0 0.0
        %307 = vmatprep.subr.mxu0 0.0
        %308 = vmatpush2.msra.mxu0 0.0
        %309 = vmatprep.subr.mxu0 0.0
        %310 = vmatpush2.msra.mxu0 0.0
        %311 = vmatprep.subr.mxu0 0.0
        %312 = vmatpush2.msra.mxu0 0.0
        %313 = vmatprep.subr.mxu0 0.0
        %314 = vmatpush2.msra.mxu0 0.0
        %315 = vmatprep.subr.mxu0 0.0
        %316 = vmatpush2.msra.mxu0 0.0
        %317 = vmatprep.subr.mxu0 0.0
        %318 = vmatpush2.msra.mxu0 0.0
        %319 = vmatprep.subr.mxu0 0.0
        %320 = vmatpush2.msra.mxu0 0.0
        %321 = vmatprep.subr.mxu0 0.0
        %322 = vmatpush2.msra.mxu0 0.0
        %323 = vmatprep.subr.mxu0 0.0
        %324 = vmatpush2.msra.mxu0 0.0
        %325 = vmatprep.subr.mxu0 0.0
        %326 = vmatpush2.msra.mxu0 0.0
        %327 = vmatprep.subr.mxu0 0.0
        %328 = vmatpush2.msra.mxu0 0.0
        %329 = vmatprep.mubr.f32.mxu0 0.0
        %330 = vmatmul.mubr.f32.gmra.mxu0 %v260
        %v331 = vpop.f32.mrf.mxu0
        %v332 = vadd.f32 %v256, %v331
        %v333 = vpop.f32.mrf.mxu0
        %334 = vdwg.mxu0
        %v335 = vmax.f32 %v332, 0.0
        %vm336 = vcmask 125952
        %337 = vst.msk [vmem:[%s215] sm:$0xf] %vm336, %v335
        %s338 = sand.u32 %s137, 1
        %s339 = scalar_lea.sflag [#allocation3], %s338
        %s340 = sand.u32 %s137, 1
        %s341 = smul.addr %s340, 4
        %s342 = scalar_lea.vmem [#allocation2], %s341
        // Predicated region
        $region41: #{temp_conv_forward.3} parent=39 // pred_check
          %p343 = pneg %p147
        $region42: #{temp_conv_forward.3} parent=39 // pred_check_branch
          %345 = sbr.rel (%p343) target = $region44
        $region43: #{temp_conv_forward.3} parent=39 // pred_region
          %s347 = ssub.s32 64, 64
          %348 = vsyncadd %s339, %s347
          %s349 = smul.addr %s19, 64
          %s350 = scalar_lea.hbm %s5, %s349
          %s352 = sshll.u32 %s342, 4
          %s353 = int_to_ptr.vmem [resolvable:$true] %s352
          %355 = dma.vmem_to_hbm [thread:$0]  %s353, 64, %s350, %s339
        $region44: #{temp_conv_forward.3} parent=39 // pred_fallthru
          _
      $region40: #{temp_conv_forward.3} parent=5 // pred_fallthru
        _
      %p356 = scmp.le.s32.totalorder 2, %s14
      // Predicated region
      $region45: #{temp_conv_forward.3} parent=5 // pred_check
        %p357 = pneg %p356
      $region46: #{temp_conv_forward.3} parent=5 // pred_check_branch
        %359 = sbr.rel (%p357) target = $region48
      $region47: #{temp_conv_forward.3} parent=5 // pred_region
        %s360 = ssub.s32 %s14, 2
        // Predicated region
        $region49: #{temp_conv_forward.3} parent=47 // pred_check
          %p361 = pneg %p153
        $region50: #{temp_conv_forward.3} parent=47 // pred_check_branch
          %363 = sbr.rel (%p361) target = $region52
        $region51: #{temp_conv_forward.3} parent=47 // pred_region
          %s364 = sand.u32 %s138, 1
          %s365 = scalar_lea.sflag [#allocation3], %s364
          %s366 = sand.u32 %s138, 1
          %s367 = smul.addr %s366, 4
          %s368 = scalar_lea.vmem [#allocation2], %s367
          %369 = dma.done %s365, 64
        $region52: #{temp_conv_forward.3} parent=47 // pred_fallthru
          _
      $region48: #{temp_conv_forward.3} parent=5 // pred_fallthru
        _
    $region6: #{temp_conv_forward.3} parent=1 // loop_footer
      %s18 = sadd.s32 1, %s14
    $region7: #{temp_conv_forward.3} parent=1 // loop_footer_branch
      %13 = sbr.rel target = $region3
    $region8: #{temp_conv_forward.3} parent=1 // loop_exit
      _
    %370 = vsyncpa [#allocation3], 1
    %s371 = scalar_lea.sflag [#allocation3], 1
    %372 = vsyncpa %s371, 1

</llo_original>
